<compile_context>
chip_gen: v5e
topology: v5e:2x2
jax: 0.10.0
libtpu: 0.0.40
codegen_flags: <defaults>
</compile_context>

<pallas_src>
import functools

import jax
import jax.numpy as jnp
from jax.experimental import pallas as pl
from jax.experimental.pallas import tpu as pltpu

EPS = 0.8          # nn.BatchNorm2d(out_size, 0.8) -> eps = 0.8
NEG_SLOPE = 0.2    # LeakyReLU(0.2)
LANE = 128
SUBLANE = 8


def _round_up(x, n):
    return ((x + n - 1) // n) * n


def _conv_stats_kernel(patches_ref, w_ref, y_ref, stats_ref):
    # patches_ref: (TM, K)  bf16  — im2col rows for this M tile
    # w_ref:       (K, Cp)  bf16  — conv weight, VMEM-resident across tiles
    # y_ref:       (TM, Cp) f32   — conv output tile
    # stats_ref:   (8, Cp)  f32   — per-tile partials: row 0 = sum, row 1 = sum of squares
    y = jnp.dot(patches_ref[...], w_ref[...], preferred_element_type=jnp.float32)
    y_ref[...] = y
    s = jnp.sum(y, axis=0, keepdims=True)          # (1, Cp)
    ss = jnp.sum(y * y, axis=0, keepdims=True)     # (1, Cp)
    pad = jnp.zeros((SUBLANE - 2, y.shape[1]), jnp.float32)
    stats_ref[...] = jnp.concatenate([s, ss, pad], axis=0)


def _bn_lrelu_kernel(y_ref, scale_ref, shift_ref, out_ref):
    # y_ref: (TM, Cp) f32 ; scale/shift: (1, Cp) f32 (resident) ; out_ref: (TM, Cp) f32
    z = y_ref[...] * scale_ref[...] + shift_ref[...]
    out_ref[...] = jnp.where(z >= 0, z, NEG_SLOPE * z)


def _im2col_nhwc(x_nhwc, ksize=3, stride=2, pad=1):
    """Extract (kh, kw, cin)-ordered 3x3 patches. Returns (N*Ho*Wo, k*k*C), Ho, Wo."""
    n, h, w, c = x_nhwc.shape
    xp = jnp.pad(x_nhwc, ((0, 0), (pad, pad), (pad, pad), (0, 0)))
    ho = (h + 2 * pad - ksize) // stride + 1
    wo = (w + 2 * pad - ksize) // stride + 1
    cols = []
    for kh in range(ksize):
        for kw in range(ksize):
            cols.append(xp[:, kh:kh + stride * ho:stride, kw:kw + stride * wo:stride, :])
    patches = jnp.concatenate(cols, axis=-1)
    return patches.reshape(n * ho * wo, ksize * ksize * c), ho, wo


@functools.partial(jax.jit, static_argnames=("tm",))
def unet_down(x_nchw, weight_oihw, gamma, beta, *, tm=1024):
    """Forward pass of UNetDown. x_nchw: (N, Cin, H, W). Returns (N, Cout, Ho, Wo)."""
    n, cin, h, w = x_nchw.shape
    cout = weight_oihw.shape[0]

    # TODO(synk): build the 3x3/stride-2 patches in-kernel from NHWC row-strips instead of
    # materializing the ~9x-expanded im2col array through HBM.
    x_nhwc = jnp.transpose(x_nchw, (0, 2, 3, 1)).astype(jnp.float32)
    patches, ho, wo = _im2col_nhwc(x_nhwc)                           # (M, K)
    m, k = patches.shape

    cp = _round_up(cout, LANE)                  # lane-dense output channel count
    tm_eff = _round_up(min(tm, m), SUBLANE)     # M tile, multiple of 8 sublanes
    m_pad = _round_up(m, tm_eff)
    num_tiles = m_pad // tm_eff

    patches_p = jnp.pad(patches, ((0, m_pad - m), (0, 0))).astype(jnp.bfloat16)
    # OIHW -> (kh, kw, cin, cout) -> (K, Cout), matching patch element ordering; pad Cout.
    w2d = jnp.transpose(weight_oihw, (2, 3, 1, 0)).reshape(k, cout).astype(jnp.float32)
    w2d = jnp.pad(w2d, ((0, 0), (0, cp - cout))).astype(jnp.bfloat16)
    gamma_p = jnp.pad(gamma.astype(jnp.float32), (0, cp - cout))
    beta_p = jnp.pad(beta.astype(jnp.float32), (0, cp - cout))

    cparams = pltpu.CompilerParams(
        dimension_semantics=("parallel",),
        vmem_limit_bytes=32 * 1024 * 1024,
    )

    # Pass 1: conv-as-matmul per M tile + per-tile partial BN statistics.
    y_flat, partials = pl.pallas_call(
        _conv_stats_kernel,
        out_shape=(
            jax.ShapeDtypeStruct((m_pad, cp), jnp.float32),
            jax.ShapeDtypeStruct((num_tiles * SUBLANE, cp), jnp.float32),
        ),
        grid=(num_tiles,),
        in_specs=[
            pl.BlockSpec((tm_eff, k), lambda i: (i, 0)),
            pl.BlockSpec((k, cp), lambda i: (0, 0)),      # weight: resident in VMEM
        ],
        out_specs=(
            pl.BlockSpec((tm_eff, cp), lambda i: (i, 0)),
            pl.BlockSpec((SUBLANE, cp), lambda i: (i, 0)),
        ),
        compiler_params=cparams,
    )(patches_p, w2d)

    # Tiny cross-tile reduction + fold gamma/beta into per-channel scale/shift (XLA, (Cp,)).
    part = partials.reshape(num_tiles, SUBLANE, cp)
    total = jnp.sum(part[:, 0, :], axis=0)                 # padded rows contributed 0
    total_sq = jnp.sum(part[:, 1, :], axis=0)
    m_f = jnp.float32(m)                                    # divide by TRUE row count
    mean = total / m_f
    var = jnp.maximum(total_sq / m_f - mean * mean, 0.0)    # E[y^2]-mean^2, safe w/ eps=0.8
    scale = gamma_p * jax.lax.rsqrt(var + EPS)
    shift = beta_p - mean * scale

    # Pass 2: fused scale/shift + LeakyReLU per M tile.
    out2d = pl.pallas_call(
        _bn_lrelu_kernel,
        out_shape=jax.ShapeDtypeStruct((m_pad, cp), jnp.float32),
        grid=(num_tiles,),
        in_specs=[
            pl.BlockSpec((tm_eff, cp), lambda i: (i, 0)),
            pl.BlockSpec((1, cp), lambda i: (0, 0)),        # scale: resident
            pl.BlockSpec((1, cp), lambda i: (0, 0)),        # shift: resident
        ],
        out_specs=pl.BlockSpec((tm_eff, cp), lambda i: (i, 0)),
        compiler_params=cparams,
    )(y_flat, scale.reshape(1, cp), shift.reshape(1, cp))

    out_nhwc = out2d[:m, :cout].reshape(n, ho, wo, cout)
    return jnp.transpose(out_nhwc, (0, 3, 1, 2))             # NCHW


def _reference(x_nchw, weight_oihw, gamma, beta, *, matmul_dtype=jnp.bfloat16):
    """Pure-JAX reference replicating the PyTorch forward (training-mode BN)."""
    y = jax.lax.conv_general_dilated(
        x_nchw.astype(matmul_dtype), weight_oihw.astype(matmul_dtype),
        window_strides=(2, 2), padding=((1, 1), (1, 1)),
        dimension_numbers=("NCHW", "OIHW", "NCHW"),
        preferred_element_type=jnp.float32)
    mean = y.mean(axis=(0, 2, 3), keepdims=True)
    var = ((y - mean) ** 2).mean(axis=(0, 2, 3), keepdims=True)
    y_bn = (y - mean) / jnp.sqrt(var + EPS)
    y_bn = y_bn * gamma.reshape(1, -1, 1, 1) + beta.reshape(1, -1, 1, 1)
    return jnp.where(y_bn >= 0, y_bn, NEG_SLOPE * y_bn)


if __name__ == "__main__":
    key = jax.random.PRNGKey(0)
    k_x, k_w, k_g, k_b = jax.random.split(key, 4)

    N, CIN, COUT, H, W = 2, 4, 8, 16, 16
    x = jax.random.normal(k_x, (N, CIN, H, W), dtype=jnp.float32)
    weight = 0.1 * jax.random.normal(k_w, (COUT, CIN, 3, 3), dtype=jnp.float32)  # bias=False
    gamma = 1.0 + 0.05 * jax.random.normal(k_g, (COUT,), dtype=jnp.float32)       # BN weight
    beta = 0.05 * jax.random.normal(k_b, (COUT,), dtype=jnp.float32)              # BN bias

    # tm=32 so the 128-row toy problem runs as a 4-tile grid (exercises pipelining,
    # resident-weight reuse, and the cross-tile stats reduction).
    out = unet_down(x, weight, gamma, beta, tm=32)
    out = jax.block_until_ready(out)
    assert out.shape == (N, COUT, H // 2, W // 2), out.shape

    # Primary check: reference with the same bf16 matmul inputs / f32 accumulation.
    ref_bf16 = _reference(x, weight, gamma, beta, matmul_dtype=jnp.bfloat16)
    err_bf16 = float(jnp.max(jnp.abs(out - ref_bf16)))
    assert jnp.allclose(out, ref_bf16, atol=1e-3, rtol=1e-3), err_bf16

    # Sanity: still close to the full-f32 PyTorch semantics.
    ref_f32 = _reference(x, weight, gamma, beta, matmul_dtype=jnp.float32)
    err_f32 = float(jnp.max(jnp.abs(out - ref_f32)))
    assert jnp.allclose(out, ref_f32, atol=5e-2, rtol=5e-2), err_f32

    print("KERNEL_OK")
</pallas_src>

<mosaic_0001>
module attributes {stable_mosaic.version = 11 : i64} {
  func.func @_conv_stats_kernel(%arg0: i32, %arg1: memref<32x36xbf16, #tpu.memory_space<vmem>>, %arg2: memref<36x128xbf16, #tpu.memory_space<vmem>>, %arg3: memref<32x128xf32, #tpu.memory_space<vmem>>, %arg4: memref<8x128xf32, #tpu.memory_space<vmem>>) attributes {dimension_semantics = [#tpu.dimension_semantics<parallel>], iteration_bounds = array<i64: 4>, scalar_prefetch = 0 : i64, scratch_operands = 0 : i64, tpu.core_type = #tpu.core_type<tc>, window_params = [{transform_indices = @transform_0, window_bounds = array<i64: 32, 36>}, {pipeline_mode = #tpu.pipeline_mode<synchronous>, transform_indices = @transform_1, window_bounds = array<i64: 36, 128>}, {transform_indices = @transform_2, window_bounds = array<i64: 32, 128>}, {transform_indices = @transform_3, window_bounds = array<i64: 8, 128>}]} {
    %c0 = arith.constant 0 : index
    %c0_0 = arith.constant 0 : index
    %0 = vector.load %arg1[%c0, %c0_0] : memref<32x36xbf16, #tpu.memory_space<vmem>>, vector<32x36xbf16>
    %c0_1 = arith.constant 0 : index
    %c0_2 = arith.constant 0 : index
    %1 = vector.load %arg2[%c0_1, %c0_2] : memref<36x128xbf16, #tpu.memory_space<vmem>>, vector<36x128xbf16>
    %cst = arith.constant dense<0.000000e+00> : vector<32x128xf32>
    %2 = tpu.matmul %0, %1, %cst {dimension_numbers = #tpu.dot_dimension_numbers<[1], [0], [0], [1], [0, 0, 1, 1], [], []>} : vector<32x36xbf16>, vector<36x128xbf16>, vector<32x128xf32> -> vector<32x128xf32>
    %c0_3 = arith.constant 0 : index
    %c0_4 = arith.constant 0 : index
    %3 = vector.load %arg3[%c0_3, %c0_4] : memref<32x128xf32, #tpu.memory_space<vmem>>, vector<32x128xf32>
    tpu.vector_store %arg3[%c0_3, %c0_4], %2 {strides = array<i32>} : memref<32x128xf32, #tpu.memory_space<vmem>>, vector<32x128xf32>,
    %cst_5 = arith.constant dense<0.000000e+00> : vector<128xf32>
    %4 = vector.multi_reduction <add>, %2, %cst_5 [0] : vector<32x128xf32> to vector<128xf32>
    %5 = vector.shape_cast %4 : vector<128xf32> to vector<1x128xf32>
    %6 = arith.mulf %2, %2 : vector<32x128xf32>
    %cst_6 = arith.constant dense<0.000000e+00> : vector<128xf32>
    %7 = vector.multi_reduction <add>, %6, %cst_6 [0] : vector<32x128xf32> to vector<128xf32>
    %8 = vector.shape_cast %7 : vector<128xf32> to vector<1x128xf32>
    %cst_7 = arith.constant 0.000000e+00 : f32
    %9 = vector.broadcast %cst_7 : f32 to vector<6x128xf32>
    %10 = tpu.concatenate %5, %8, %9 in 0 : vector<1x128xf32>, vector<1x128xf32>, vector<6x128xf32> -> vector<8x128xf32>
    %c0_8 = arith.constant 0 : index
    %c0_9 = arith.constant 0 : index
    %11 = vector.load %arg4[%c0_8, %c0_9] : memref<8x128xf32, #tpu.memory_space<vmem>>, vector<8x128xf32>
    tpu.vector_store %arg4[%c0_8, %c0_9], %10 {strides = array<i32>} : memref<8x128xf32, #tpu.memory_space<vmem>>, vector<8x128xf32>,
    return
  }
  func.func @transform_0(%arg0: i32) -> (i32, i32) {
    %c0_i32 = arith.constant 0 : i32
    %c0_i32_0 = arith.constant 0 : i32
    return %arg0, %c0_i32 : i32, i32
  }
  func.func @transform_1(%arg0: i32) -> (i32, i32) {
    %c0_i32 = arith.constant 0 : i32
    %c0_i32_0 = arith.constant 0 : i32
    %c0_i32_1 = arith.constant 0 : i32
    return %c0_i32, %c0_i32_0 : i32, i32
  }
  func.func @transform_2(%arg0: i32) -> (i32, i32) {
    %c0_i32 = arith.constant 0 : i32
    %c0_i32_0 = arith.constant 0 : i32
    return %arg0, %c0_i32 : i32, i32
  }
  func.func @transform_3(%arg0: i32) -> (i32, i32) {
    %c0_i32 = arith.constant 0 : i32
    %c0_i32_0 = arith.constant 0 : i32
    return %arg0, %c0_i32 : i32, i32
  }
}

module attributes {stable_mosaic.version = 11 : i64} {
  func.func @_bn_lrelu_kernel(%arg0: i32, %arg1: memref<32x128xf32, #tpu.memory_space<vmem>>, %arg2: memref<1x128xf32, #tpu.memory_space<vmem>>, %arg3: memref<1x128xf32, #tpu.memory_space<vmem>>, %arg4: memref<32x128xf32, #tpu.memory_space<vmem>>) attributes {dimension_semantics = [#tpu.dimension_semantics<parallel>], iteration_bounds = array<i64: 4>, scalar_prefetch = 0 : i64, scratch_operands = 0 : i64, tpu.core_type = #tpu.core_type<tc>, window_params = [{transform_indices = @transform_0, window_bounds = array<i64: 32, 128>}, {pipeline_mode = #tpu.pipeline_mode<synchronous>, transform_indices = @transform_1, window_bounds = array<i64: 1, 128>}, {pipeline_mode = #tpu.pipeline_mode<synchronous>, transform_indices = @transform_2, window_bounds = array<i64: 1, 128>}, {transform_indices = @transform_3, window_bounds = array<i64: 32, 128>}]} {
    %c0 = arith.constant 0 : index
    %c0_0 = arith.constant 0 : index
    %0 = vector.load %arg1[%c0, %c0_0] : memref<32x128xf32, #tpu.memory_space<vmem>>, vector<32x128xf32>
    %c0_1 = arith.constant 0 : index
    %c0_2 = arith.constant 0 : index
    %1 = vector.load %arg2[%c0_1, %c0_2] : memref<1x128xf32, #tpu.memory_space<vmem>>, vector<1x128xf32>
    %2 = vector.broadcast %1 : vector<1x128xf32> to vector<32x128xf32>
    %3 = arith.mulf %0, %2 : vector<32x128xf32>
    %c0_3 = arith.constant 0 : index
    %c0_4 = arith.constant 0 : index
    %4 = vector.load %arg3[%c0_3, %c0_4] : memref<1x128xf32, #tpu.memory_space<vmem>>, vector<1x128xf32>
    %5 = vector.broadcast %4 : vector<1x128xf32> to vector<32x128xf32>
    %6 = arith.addf %3, %5 : vector<32x128xf32>
    %cst = arith.constant 0.000000e+00 : f32
    %7 = vector.broadcast %cst : f32 to vector<32x128xf32>
    %8 = arith.cmpf oge, %6, %7 : vector<32x128xf32>
    %cst_5 = arith.constant 2.000000e-01 : f32
    %9 = vector.broadcast %cst_5 : f32 to vector<32x128xf32>
    %10 = arith.mulf %9, %6 : vector<32x128xf32>
    %11 = arith.select %8, %6, %10 : vector<32x128xi1>, vector<32x128xf32>
    %c0_6 = arith.constant 0 : index
    %c0_7 = arith.constant 0 : index
    %12 = vector.load %arg4[%c0_6, %c0_7] : memref<32x128xf32, #tpu.memory_space<vmem>>, vector<32x128xf32>
    tpu.vector_store %arg4[%c0_6, %c0_7], %11 {strides = array<i32>} : memref<32x128xf32, #tpu.memory_space<vmem>>, vector<32x128xf32>,
    return
  }
  func.func @transform_0(%arg0: i32) -> (i32, i32) {
    %c0_i32 = arith.constant 0 : i32
    %c0_i32_0 = arith.constant 0 : i32
    return %arg0, %c0_i32 : i32, i32
  }
  func.func @transform_1(%arg0: i32) -> (i32, i32) {
    %c0_i32 = arith.constant 0 : i32
    %c0_i32_0 = arith.constant 0 : i32
    %c0_i32_1 = arith.constant 0 : i32
    return %c0_i32, %c0_i32_0 : i32, i32
  }
  func.func @transform_2(%arg0: i32) -> (i32, i32) {
    %c0_i32 = arith.constant 0 : i32
    %c0_i32_0 = arith.constant 0 : i32
    %c0_i32_1 = arith.constant 0 : i32
    return %c0_i32, %c0_i32_0 : i32, i32
  }
  func.func @transform_3(%arg0: i32) -> (i32, i32) {
    %c0_i32 = arith.constant 0 : i32
    %c0_i32_0 = arith.constant 0 : i32
    return %arg0, %c0_i32 : i32, i32
  }
}

</mosaic_0001>

<llo_original>
// kernel: unet_down.3
$region0: #{unet_down.3}
  #allocation0 [shape = 'u32[]', space=smem, size = 0x4, offset = 0x4, fixed_abs, tag = 'smem constant byte address 0x4 - core index']
  #allocation1 [shape = 'u32[72,128]{1,0:T(1,128)}', space=vmem, size = 0x9000, scoped, tag = 'internal scratch']
  %s0 = inlined_call_operand.vmem [shape: f32[128,128], index: 0, kind: input, shape index: {}]
  %s1 = inlined_call_operand.vmem [shape: f32[1,128], index: 1, kind: input, shape index: {}]
  %s2 = inlined_call_operand.vmem [shape: f32[1,128], index: 2, kind: input, shape index: {}]
  %s3 = inlined_call_operand.vmem [shape: f32[128,128], index: 3, kind: output, shape index: {}]
  %s4 = sld [smem:[#allocation0]]
  $region45: #{unet_down.3} parent=0
    _
  %s6 = ssub.s32 1, %s4
  %s7 = scalar_select 0, %s6, %s4
  loop: start=0, step=1, limit=6
  $region2: #{unet_down.3} parent=0 // loop_pre_header
    _
  $region3: #{unet_down.3} parent=0 // loop_header
    %s9 = sphi 0, %s13
    %p10 = scmp.ge.s32.totalorder %s9, 6
    %s19 = sphi 0, %s21
    %s22 = sphi 0, %s19
    %s23 = sphi 0, %s22
    %s39 = sphi 0, %s23
    %s43 = sphi 0, %s43
    %s45 = sphi 0, %s43
    %s46 = sphi 0, %s45
    %s60 = sphi 0, %s46
    %s64 = sphi 0, %s64
    %s66 = sphi 0, %s64
    %s67 = sphi 0, %s66
    %s81 = sphi 0, %s67
    %s87 = sphi 0, %s89
    %s90 = sphi 0, %s87
    %s91 = sphi 0, %s90
    %s107 = sphi 0, %s91
  $region4: #{unet_down.3} parent=0 // loop_header_branch
    %12 = sbr.rel (%p10) target = $region8
  $region5: #{unet_down.3} parent=0 // loop_body
    %s14 = ssub.s32 %s9, 1
    %s15 = ssub.s32 %s9, 2
    %s16 = sadd.s32 %s9, 1
    %s17 = ssub.s32 %s9, %s16
    %p18 = scmp.eq.s32.totalorder %s17, 0
    %s20 = sadd.s32 %s19, 1
    %s21 = scalar_select %p18, %s19, %s20
    %p24 = pneg %p18
    %p25 = scmp.eq.s32.totalorder %s9, 3
    %p26 = por %p24, %p25
    %p27 = scmp.ne.s32.totalorder %s19, %s22
    %p28 = scmp.eq.s32.totalorder %s9, 0
    %p29 = por %p27, %p28
    %p30 = scmp.ne.s32.totalorder %s19, %s22
    %p31 = scmp.eq.s32.totalorder %s14, 3
    %p32 = por %p30, %p31
    %p33 = scmp.ne.s32.totalorder %s22, %s23
    %p34 = scmp.eq.s32.totalorder %s14, 0
    %p35 = por %p33, %p34
    %p36 = scmp.ne.s32.totalorder %s22, %s23
    %p37 = scmp.eq.s32.totalorder %s15, 3
    %p38 = por %p36, %p37
    %p40 = scmp.ne.s32.totalorder %s23, %s39
    %p41 = scmp.eq.s32.totalorder %s15, 0
    %p42 = por %p40, %p41
    %s44 = sadd.s32 %s43, 1
    %p47 = scmp.eq.s32.totalorder %s9, 3
    %p48 = scmp.ne.s32.totalorder %s43, %s45
    %p49 = scmp.eq.s32.totalorder %s9, 0
    %p50 = por %p48, %p49
    %p51 = scmp.ne.s32.totalorder %s43, %s45
    %p52 = scmp.eq.s32.totalorder %s14, 3
    %p53 = por %p51, %p52
    %p54 = scmp.ne.s32.totalorder %s45, %s46
    %p55 = scmp.eq.s32.totalorder %s14, 0
    %p56 = por %p54, %p55
    %p57 = scmp.ne.s32.totalorder %s45, %s46
    %p58 = scmp.eq.s32.totalorder %s15, 3
    %p59 = por %p57, %p58
    %p61 = scmp.ne.s32.totalorder %s46, %s60
    %p62 = scmp.eq.s32.totalorder %s15, 0
    %p63 = por %p61, %p62
    %s65 = sadd.s32 %s64, 1
    %p68 = scmp.eq.s32.totalorder %s9, 3
    %p69 = scmp.ne.s32.totalorder %s64, %s66
    %p70 = scmp.eq.s32.totalorder %s9, 0
    %p71 = por %p69, %p70
    %p72 = scmp.ne.s32.totalorder %s64, %s66
    %p73 = scmp.eq.s32.totalorder %s14, 3
    %p74 = por %p72, %p73
    %p75 = scmp.ne.s32.totalorder %s66, %s67
    %p76 = scmp.eq.s32.totalorder %s14, 0
    %p77 = por %p75, %p76
    %p78 = scmp.ne.s32.totalorder %s66, %s67
    %p79 = scmp.eq.s32.totalorder %s15, 3
    %p80 = por %p78, %p79
    %p82 = scmp.ne.s32.totalorder %s67, %s81
    %p83 = scmp.eq.s32.totalorder %s15, 0
    %p84 = por %p82, %p83
    %s85 = ssub.s32 %s9, %s16
    %p86 = scmp.eq.s32.totalorder %s85, 0
    %s88 = sadd.s32 %s87, 1
    %s89 = scalar_select %p86, %s87, %s88
    %p92 = pneg %p86
    %p93 = scmp.eq.s32.totalorder %s9, 3
    %p94 = por %p92, %p93
    %p95 = scmp.ne.s32.totalorder %s87, %s90
    %p96 = scmp.eq.s32.totalorder %s9, 0
    %p97 = por %p95, %p96
    %p98 = scmp.ne.s32.totalorder %s87, %s90
    %p99 = scmp.eq.s32.totalorder %s14, 3
    %p100 = por %p98, %p99
    %p101 = scmp.ne.s32.totalorder %s90, %s91
    %p102 = scmp.eq.s32.totalorder %s14, 0
    %p103 = por %p101, %p102
    %p104 = scmp.ne.s32.totalorder %s90, %s91
    %p105 = scmp.eq.s32.totalorder %s15, 3
    %p106 = por %p104, %p105
    %p108 = scmp.ne.s32.totalorder %s91, %s107
    %p109 = scmp.eq.s32.totalorder %s15, 0
    %p110 = por %p108, %p109
    %p111 = scmp.le.s32.totalorder 1, %s9
    %p112 = scmp.lt.s32.totalorder %s9, 5
    %p113 = pnand %p111, %p112
    %p114 = pneg %p113
    // Predicated region
    $region9: #{unet_down.3} parent=5 // pred_check
      _
    $region10: #{unet_down.3} parent=5 // pred_check_branch
      %116 = sbr.rel (%p113) target = $region12
    $region11: #{unet_down.3} parent=5 // pred_region
      %s117 = ssub.s32 %s9, 1
      // Predicated region
      $region13: #{unet_down.3} parent=11 // pred_check
        %p118 = pneg %p56
      $region14: #{unet_down.3} parent=11 // pred_check_branch
        %120 = sbr.rel (%p118) target = $region16
      $region15: #{unet_down.3} parent=11 // pred_region
        _
      $region16: #{unet_down.3} parent=11 // pred_fallthru
        _
      // Predicated region
      $region17: #{unet_down.3} parent=11 // pred_check
        %p121 = pneg %p77
      $region18: #{unet_down.3} parent=11 // pred_check_branch
        %123 = sbr.rel (%p121) target = $region20
      $region19: #{unet_down.3} parent=11 // pred_region
        _
      $region20: #{unet_down.3} parent=11 // pred_fallthru
        _
    $region12: #{unet_down.3} parent=5 // pred_fallthru
      _
    %p124 = scmp.lt.s32.totalorder %s9, 4
    // Predicated region
    $region21: #{unet_down.3} parent=5 // pred_check
      %p125 = pneg %p124
    $region22: #{unet_down.3} parent=5 // pred_check_branch
      %127 = sbr.rel (%p125) target = $region24
    $region23: #{unet_down.3} parent=5 // pred_region
      // Predicated region
      $region25: #{unet_down.3} parent=23 // pred_check
        %p128 = pneg %p29
      $region26: #{unet_down.3} parent=23 // pred_check_branch
        %130 = sbr.rel (%p128) target = $region28
      $region27: #{unet_down.3} parent=23 // pred_region
        %s131 = smul.u32 4, %s9
        %p132 = scmp.lt.s32.totalorder %s131, 15
        %s133 = scalar_select %p132, %s131, 15
        %s134 = smul.addr %s133, 8
        %s135 = scalar_lea.vmem %s0, %s134
        %s136 = smul.u32 4, %s9
      $region28: #{unet_down.3} parent=23 // pred_fallthru
        _
    $region24: #{unet_down.3} parent=5 // pred_fallthru
      _
    %p137 = scmp.le.s32.totalorder 1, %s9
    %p138 = scmp.lt.s32.totalorder %s9, 5
    %p139 = pnand %p137, %p138
    %p140 = pneg %p139
    // Predicated region
    $region29: #{unet_down.3} parent=5 // pred_check
      _
    $region30: #{unet_down.3} parent=5 // pred_check_branch
      %142 = sbr.rel (%p139) target = $region32
    $region31: #{unet_down.3} parent=5 // pred_region
      %s143 = ssub.s32 %s9, 1
      %s144 = smul.u32 4, %s14
      %p145 = scmp.lt.s32.totalorder %s144, 15
      %s146 = scalar_select %p145, %s144, 15
      %s147 = smul.addr %s146, 8
      %s148 = scalar_lea.vmem %s0, %s147
      %p149 = pneg %p35
      %p150 = pneg %p32
      %p151 = pneg %p56
      %p152 = pneg %p53
      %p153 = pneg %p77
      %p154 = pneg %p74
      %p155 = pneg %p103
      %p156 = pneg %p100
      %s157 = smul.u32 4, %s14
      %p158 = scmp.lt.s32.totalorder %s157, 15
      %s159 = scalar_select %p158, %s157, 15
      %s160 = smul.addr %s159, 8
      %s161 = scalar_lea.vmem %s3, %s160
      %s162 = smul.u32 4, %s14
      %p163 = scmp.lt.s32.totalorder %s162, 15
      %s164 = scalar_select %p163, %s162, 15
      %s165 = smul.addr %s164, 8
      %s166 = scalar_lea.vmem %s0, %s165
      %s167 = smul.u32 4, %s14
      %s168 = smul.u32 4, %s14
      %p169 = scmp.lt.s32.totalorder %s168, 15
      %s170 = scalar_select %p169, %s168, 15
      %s171 = smul.addr %s170, 8
      %s172 = scalar_lea.vmem %s3, %s171
      %s173 = smul.u32 4, %s14
      %v174 = vld [vmem:[%s166] sm:$0xff]
      %v175 = vld [vmem:[%s166 + $0x8] sm:$0xff]
      %v176 = vld [vmem:[%s166 + $0x10] sm:$0xff]
      %v177 = vld [vmem:[%s166 + $0x18] sm:$0xff]
      %v178 = vld [vmem:[%s1] sm:$0x1]
      %v180 = vperm.slane %v178, 0
      %v182 = vmul.f32 %v174, %v180
      %v183 = vmul.f32 %v175, %v180
      %v184 = vmul.f32 %v176, %v180
      %v185 = vmul.f32 %v177, %v180
      %v186 = vld [vmem:[%s2] sm:$0x1]
      %v188 = vperm.slane %v186, 0
      %v190 = vadd.f32 %v182, %v188
      %v191 = vadd.f32 %v183, %v188
      %v192 = vadd.f32 %v184, %v188
      %v193 = vadd.f32 %v185, %v188
      %vm194 = vcmp.ge.f32.partialorder %v190, 0.0
      %vm195 = vcmp.ge.f32.partialorder %v191, 0.0
      %vm196 = vcmp.ge.f32.partialorder %v192, 0.0
      %vm197 = vcmp.ge.f32.partialorder %v193, 0.0
      %v198 = vmul.f32 %v190, 0.2
      %v199 = vmul.f32 %v191, 0.2
      %v200 = vmul.f32 %v192, 0.2
      %v201 = vmul.f32 %v193, 0.2
      %v202 = vsel %vm194, %v190, %v198
      %v203 = vsel %vm195, %v191, %v199
      %v204 = vsel %vm196, %v192, %v200
      %v205 = vsel %vm197, %v193, %v201
      %206 = vst [vmem:[%s172] sm:$0xff] %v202
      %207 = vst [vmem:[%s172 + $0x8] sm:$0xff] %v203
      %208 = vst [vmem:[%s172 + $0x10] sm:$0xff] %v204
      %209 = vst [vmem:[%s172 + $0x18] sm:$0xff] %v205
      %s210 = smul.u32 4, %s14
      %p211 = scmp.lt.s32.totalorder %s210, 15
      %s212 = scalar_select %p211, %s210, 15
      %s213 = smul.addr %s212, 8
      %s214 = scalar_lea.vmem %s3, %s213
      // Predicated region
      $region33: #{unet_down.3} parent=31 // pred_check
        %p215 = pneg %p100
      $region34: #{unet_down.3} parent=31 // pred_check_branch
        %217 = sbr.rel (%p215) target = $region36
      $region35: #{unet_down.3} parent=31 // pred_region
        %s218 = smul.u32 4, %s14
      $region36: #{unet_down.3} parent=31 // pred_fallthru
        _
    $region32: #{unet_down.3} parent=5 // pred_fallthru
      _
    %p219 = scmp.le.s32.totalorder 2, %s9
    // Predicated region
    $region37: #{unet_down.3} parent=5 // pred_check
      %p220 = pneg %p219
    $region38: #{unet_down.3} parent=5 // pred_check_branch
      %222 = sbr.rel (%p220) target = $region40
    $region39: #{unet_down.3} parent=5 // pred_region
      %s223 = ssub.s32 %s9, 2
      // Predicated region
      $region41: #{unet_down.3} parent=39 // pred_check
        %p224 = pneg %p106
      $region42: #{unet_down.3} parent=39 // pred_check_branch
        %226 = sbr.rel (%p224) target = $region44
      $region43: #{unet_down.3} parent=39 // pred_region
        %s227 = smul.u32 4, %s15
        %p228 = scmp.lt.s32.totalorder %s227, 15
        %s229 = scalar_select %p228, %s227, 15
        %s230 = smul.addr %s229, 8
        %s231 = scalar_lea.vmem %s3, %s230
      $region44: #{unet_down.3} parent=39 // pred_fallthru
        _
    $region40: #{unet_down.3} parent=5 // pred_fallthru
      _
  $region6: #{unet_down.3} parent=0 // loop_footer
    %s13 = sadd.s32 1, %s9
  $region7: #{unet_down.3} parent=0 // loop_footer_branch
    %8 = sbr.rel target = $region3
  $region8: #{unet_down.3} parent=0 // loop_exit
    _

// kernel: unet_down.2
$region0: #{unet_down.2}
  #allocation0 [shape = 'u32[]', space=smem, size = 0x4, offset = 0x4, fixed_abs, tag = 'smem constant byte address 0x4 - core index']
  #allocation1 [shape = 'u32[72,128]{1,0:T(1,128)}', space=vmem, size = 0x9000, scoped, tag = 'internal scratch']
  %s0 = inlined_call_operand.vmem [shape: bf16[128,36], index: 0, kind: input, shape index: {}]
  %s1 = inlined_call_operand.vmem [shape: bf16[36,128], index: 1, kind: input, shape index: {}]
  %s2 = inlined_call_operand.vmem [shape: f32[128,128], index: 2, kind: output, shape index: {0}]
  %s3 = inlined_call_operand.vmem [shape: f32[32,128], index: 3, kind: output, shape index: {1}]
  %4 = xla_tuple %s2, %s3
  %s5 = sld [smem:[#allocation0]]
  $region49: #{unet_down.2} parent=0
    _
  %s7 = ssub.s32 1, %s5
  %s8 = scalar_select 0, %s7, %s5
  loop: start=0, step=1, limit=6
  $region2: #{unet_down.2} parent=0 // loop_pre_header
    _
  $region3: #{unet_down.2} parent=0 // loop_header
    %s10 = sphi 0, %s14
    %p11 = scmp.ge.s32.totalorder %s10, 6
    %s20 = sphi 0, %s22
    %s23 = sphi 0, %s20
    %s24 = sphi 0, %s23
    %s40 = sphi 0, %s24
    %s44 = sphi 0, %s44
    %s46 = sphi 0, %s44
    %s47 = sphi 0, %s46
    %s61 = sphi 0, %s47
    %s67 = sphi 0, %s69
    %s70 = sphi 0, %s67
    %s71 = sphi 0, %s70
    %s87 = sphi 0, %s71
    %s93 = sphi 0, %s95
    %s96 = sphi 0, %s93
    %s97 = sphi 0, %s96
    %s113 = sphi 0, %s97
  $region4: #{unet_down.2} parent=0 // loop_header_branch
    %13 = sbr.rel (%p11) target = $region8
  $region5: #{unet_down.2} parent=0 // loop_body
    %s15 = ssub.s32 %s10, 1
    %s16 = ssub.s32 %s10, 2
    %s17 = sadd.s32 %s10, 1
    %s18 = ssub.s32 %s10, %s17
    %p19 = scmp.eq.s32.totalorder %s18, 0
    %s21 = sadd.s32 %s20, 1
    %s22 = scalar_select %p19, %s20, %s21
    %p25 = pneg %p19
    %p26 = scmp.eq.s32.totalorder %s10, 3
    %p27 = por %p25, %p26
    %p28 = scmp.ne.s32.totalorder %s20, %s23
    %p29 = scmp.eq.s32.totalorder %s10, 0
    %p30 = por %p28, %p29
    %p31 = scmp.ne.s32.totalorder %s20, %s23
    %p32 = scmp.eq.s32.totalorder %s15, 3
    %p33 = por %p31, %p32
    %p34 = scmp.ne.s32.totalorder %s23, %s24
    %p35 = scmp.eq.s32.totalorder %s15, 0
    %p36 = por %p34, %p35
    %p37 = scmp.ne.s32.totalorder %s23, %s24
    %p38 = scmp.eq.s32.totalorder %s16, 3
    %p39 = por %p37, %p38
    %p41 = scmp.ne.s32.totalorder %s24, %s40
    %p42 = scmp.eq.s32.totalorder %s16, 0
    %p43 = por %p41, %p42
    %s45 = sadd.s32 %s44, 1
    %p48 = scmp.eq.s32.totalorder %s10, 3
    %p49 = scmp.ne.s32.totalorder %s44, %s46
    %p50 = scmp.eq.s32.totalorder %s10, 0
    %p51 = por %p49, %p50
    %p52 = scmp.ne.s32.totalorder %s44, %s46
    %p53 = scmp.eq.s32.totalorder %s15, 3
    %p54 = por %p52, %p53
    %p55 = scmp.ne.s32.totalorder %s46, %s47
    %p56 = scmp.eq.s32.totalorder %s15, 0
    %p57 = por %p55, %p56
    %p58 = scmp.ne.s32.totalorder %s46, %s47
    %p59 = scmp.eq.s32.totalorder %s16, 3
    %p60 = por %p58, %p59
    %p62 = scmp.ne.s32.totalorder %s47, %s61
    %p63 = scmp.eq.s32.totalorder %s16, 0
    %p64 = por %p62, %p63
    %s65 = ssub.s32 %s10, %s17
    %p66 = scmp.eq.s32.totalorder %s65, 0
    %s68 = sadd.s32 %s67, 1
    %s69 = scalar_select %p66, %s67, %s68
    %p72 = pneg %p66
    %p73 = scmp.eq.s32.totalorder %s10, 3
    %p74 = por %p72, %p73
    %p75 = scmp.ne.s32.totalorder %s67, %s70
    %p76 = scmp.eq.s32.totalorder %s10, 0
    %p77 = por %p75, %p76
    %p78 = scmp.ne.s32.totalorder %s67, %s70
    %p79 = scmp.eq.s32.totalorder %s15, 3
    %p80 = por %p78, %p79
    %p81 = scmp.ne.s32.totalorder %s70, %s71
    %p82 = scmp.eq.s32.totalorder %s15, 0
    %p83 = por %p81, %p82
    %p84 = scmp.ne.s32.totalorder %s70, %s71
    %p85 = scmp.eq.s32.totalorder %s16, 3
    %p86 = por %p84, %p85
    %p88 = scmp.ne.s32.totalorder %s71, %s87
    %p89 = scmp.eq.s32.totalorder %s16, 0
    %p90 = por %p88, %p89
    %s91 = ssub.s32 %s10, %s17
    %p92 = scmp.eq.s32.totalorder %s91, 0
    %s94 = sadd.s32 %s93, 1
    %s95 = scalar_select %p92, %s93, %s94
    %p98 = pneg %p92
    %p99 = scmp.eq.s32.totalorder %s10, 3
    %p100 = por %p98, %p99
    %p101 = scmp.ne.s32.totalorder %s93, %s96
    %p102 = scmp.eq.s32.totalorder %s10, 0
    %p103 = por %p101, %p102
    %p104 = scmp.ne.s32.totalorder %s93, %s96
    %p105 = scmp.eq.s32.totalorder %s15, 3
    %p106 = por %p104, %p105
    %p107 = scmp.ne.s32.totalorder %s96, %s97
    %p108 = scmp.eq.s32.totalorder %s15, 0
    %p109 = por %p107, %p108
    %p110 = scmp.ne.s32.totalorder %s96, %s97
    %p111 = scmp.eq.s32.totalorder %s16, 3
    %p112 = por %p110, %p111
    %p114 = scmp.ne.s32.totalorder %s97, %s113
    %p115 = scmp.eq.s32.totalorder %s16, 0
    %p116 = por %p114, %p115
    %p117 = scmp.le.s32.totalorder 1, %s10
    %p118 = scmp.lt.s32.totalorder %s10, 5
    %p119 = pnand %p117, %p118
    %p120 = pneg %p119
    // Predicated region
    $region9: #{unet_down.2} parent=5 // pred_check
      _
    $region10: #{unet_down.2} parent=5 // pred_check_branch
      %122 = sbr.rel (%p119) target = $region12
    $region11: #{unet_down.2} parent=5 // pred_region
      %s123 = ssub.s32 %s10, 1
      // Predicated region
      $region13: #{unet_down.2} parent=11 // pred_check
        %p124 = pneg %p57
      $region14: #{unet_down.2} parent=11 // pred_check_branch
        %126 = sbr.rel (%p124) target = $region16
      $region15: #{unet_down.2} parent=11 // pred_region
        _
      $region16: #{unet_down.2} parent=11 // pred_fallthru
        _
    $region12: #{unet_down.2} parent=5 // pred_fallthru
      _
    %p127 = scmp.lt.s32.totalorder %s10, 4
    // Predicated region
    $region17: #{unet_down.2} parent=5 // pred_check
      %p128 = pneg %p127
    $region18: #{unet_down.2} parent=5 // pred_check_branch
      %130 = sbr.rel (%p128) target = $region20
    $region19: #{unet_down.2} parent=5 // pred_region
      // Predicated region
      $region21: #{unet_down.2} parent=19 // pred_check
        %p131 = pneg %p30
      $region22: #{unet_down.2} parent=19 // pred_check_branch
        %133 = sbr.rel (%p131) target = $region24
      $region23: #{unet_down.2} parent=19 // pred_region
        %s134 = smul.u32 4, %s10
        %p135 = scmp.lt.s32.totalorder %s134, 15
        %s136 = scalar_select %p135, %s134, 15
        %s137 = smul.addr %s136, 4
        %s138 = scalar_lea.vmem %s0, %s137
        %s139 = smul.u32 4, %s10
      $region24: #{unet_down.2} parent=19 // pred_fallthru
        _
    $region20: #{unet_down.2} parent=5 // pred_fallthru
      _
    %p140 = scmp.le.s32.totalorder 1, %s10
    %p141 = scmp.lt.s32.totalorder %s10, 5
    %p142 = pnand %p140, %p141
    %p143 = pneg %p142
    // Predicated region
    $region25: #{unet_down.2} parent=5 // pred_check
      _
    $region26: #{unet_down.2} parent=5 // pred_check_branch
      %145 = sbr.rel (%p142) target = $region28
    $region27: #{unet_down.2} parent=5 // pred_region
      %s146 = ssub.s32 %s10, 1
      %s147 = smul.u32 4, %s15
      %p148 = scmp.lt.s32.totalorder %s147, 15
      %s149 = scalar_select %p148, %s147, 15
      %s150 = smul.addr %s149, 4
      %s151 = scalar_lea.vmem %s0, %s150
      %p152 = pneg %p36
      %p153 = pneg %p33
      %p154 = pneg %p57
      %p155 = pneg %p54
      %p156 = pneg %p83
      %p157 = pneg %p80
      %s158 = smul.u32 4, %s15
      %p159 = scmp.lt.s32.totalorder %s158, 15
      %s160 = scalar_select %p159, %s158, 15
      %s161 = smul.addr %s160, 8
      %s162 = scalar_lea.vmem %s2, %s161
      %p163 = pneg %p109
      %p164 = pneg %p106
      %p165 = scmp.lt.s32.totalorder %s15, 3
      %s166 = scalar_select %p165, %s15, 3
      %s167 = smul.addr %s166, 8
      %s168 = scalar_lea.vmem %s3, %s167
      %s169 = smul.u32 4, %s15
      %p170 = scmp.lt.s32.totalorder %s169, 15
      %s171 = scalar_select %p170, %s169, 15
      %s172 = smul.addr %s171, 4
      %s173 = scalar_lea.vmem %s0, %s172
      %s174 = smul.u32 4, %s15
      %s175 = smul.u32 4, %s15
      %p176 = scmp.lt.s32.totalorder %s175, 15
      %s177 = scalar_select %p176, %s175, 15
      %s178 = smul.addr %s177, 8
      %s179 = scalar_lea.vmem %s2, %s178
      %s180 = smul.u32 4, %s15
      %p181 = scmp.lt.s32.totalorder %s15, 3
      %s182 = scalar_select %p181, %s15, 3
      %s183 = smul.addr %s182, 8
      %s184 = scalar_lea.vmem %s3, %s183
      %v186 = vld [vmem:[%s173] sm:$0xf]
      %v187 = vld [vmem:[%s173 + $0x4] sm:$0xf]
      %v188 = vld [vmem:[%s173 + $0x8] sm:$0xf]
      %v189 = vld [vmem:[%s173 + $0xc] sm:$0xf]
      %v190 = vld [vmem:[%s1] sm:$0xf]
      %v191 = vld [vmem:[%s1 + $0x4] sm:$0xf]
      %v192 = vld [vmem:[%s1 + $0x8] sm:$0xf]
      %v193 = vld [vmem:[%s1 + $0xc] sm:$0xf]
      %v194 = vld [vmem:[%s1 + $0x10] sm:$0x3]
      %v199 = vunpack.c.l.b16 %v186
      %v200 = vunpack.c.l.b16 %v187
      %v201 = vunpack.c.l.b16 %v188
      %v202 = vunpack.c.l.b16 %v189
      %v203 = vpack.c.b16 %v200, %v199
      %v204 = vpack.c.b16 %v202, %v201
      %v210 = vunpack.c.l.b16 %v190
      %v211 = vunpack.c.l.b16 %v191
      %v212 = vunpack.c.l.b16 %v192
      %v213 = vunpack.c.l.b16 %v193
      %v214 = vunpack.c.l.b16 %v194
      %v215 = vpack.c.b16 %v211, %v210
      %v216 = vpack.c.b16 %v213, %v212
      %v217 = vpack.c.b16 %v214, %v214
      %vm220 = vcmask 293888
      %v222 = vsel %vm220, %v203, 0
      %v225 = vsel %vm220, %v204, 0
      %vm227 = vcmask 1041408
      %v229 = vsel %vm227, %v217, 0
      %231 = vmatpush.bf16.msra.mxu0 0
      %232 = vmatpush.bf16.msra.mxu0 0
      %233 = vmatpush.bf16.msra.mxu0 0
      %234 = vmatpush.bf16.msra.mxu0 0
      %235 = vmatpush.bf16.msra.mxu0 0
      %236 = vmatpush.bf16.msra.mxu0 %v229
      %237 = vmatpush.bf16.msra.mxu0 %v216
      %238 = vmatpush.bf16.msra.mxu0 %v215
      %239 = vmatmul.bf16.gmra.mxu0 %v222
      %v240 = vpop.f32.mrf.mxu0
      %v241 = vadd.f32 0.0, %v240
      %v242 = vpop.f32.mrf.mxu0
      %v243 = vadd.f32 0.0, %v242
      %244 = vmatmul.bf16.gmra.mxu0 %v225
      %v245 = vpop.f32.mrf.mxu0
      %v246 = vadd.f32 0.0, %v245
      %v247 = vpop.f32.mrf.mxu0
      %v248 = vadd.f32 0.0, %v247
      %249 = vdwg.mxu0
      %250 = vst [vmem:[%s179] sm:$0xff] %v241
      %251 = vst [vmem:[%s179 + $0x8] sm:$0xff] %v243
      %252 = vst [vmem:[%s179 + $0x10] sm:$0xff] %v246
      %253 = vst [vmem:[%s179 + $0x18] sm:$0xff] %v248
      %v254 = vadd.f32 %v241, %v243
      %v255 = vadd.f32 %v254, %v246
      %v256 = vadd.f32 %v255, %v248
      %v257 = vrot.slane %v256, 4
      %v258 = vadd.f32 %v256, %v257
      %v259 = vrot.slane %v258, 2
      %v260 = vadd.f32 %v258, %v259
      %v261 = vrot.slane %v260, 1
      %v262 = vadd.f32 %v260, %v261
      %v263 = vmul.f32 %v241, %v241
      %v264 = vmul.f32 %v243, %v243
      %v265 = vmul.f32 %v246, %v246
      %v266 = vmul.f32 %v248, %v248
      %v267 = vadd.f32 %v263, %v264
      %v268 = vadd.f32 %v267, %v265
      %v269 = vadd.f32 %v268, %v266
      %v270 = vrot.slane %v269, 4
      %v271 = vadd.f32 %v269, %v270
      %v272 = vrot.slane %v271, 2
      %v273 = vadd.f32 %v271, %v272
      %v274 = vrot.slane %v273, 1
      %v275 = vadd.f32 %v273, %v274
      %vm276 = vcmask 1040384
      %v277 = vsel %vm276, %v262, %v275
      %v278 = vsel %vm227, %v277, 0.0
      %279 = vst [vmem:[%s184] sm:$0xff] %v278
      %s280 = smul.u32 4, %s15
      %p281 = scmp.lt.s32.totalorder %s280, 15
      %s282 = scalar_select %p281, %s280, 15
      %s283 = smul.addr %s282, 8
      %s284 = scalar_lea.vmem %s2, %s283
      %p285 = scmp.lt.s32.totalorder %s15, 3
      %s286 = scalar_select %p285, %s15, 3
      %s287 = smul.addr %s286, 8
      %s288 = scalar_lea.vmem %s3, %s287
      // Predicated region
      $region29: #{unet_down.2} parent=27 // pred_check
        %p289 = pneg %p80
      $region30: #{unet_down.2} parent=27 // pred_check_branch
        %291 = sbr.rel (%p289) target = $region32
      $region31: #{unet_down.2} parent=27 // pred_region
        %s292 = smul.u32 4, %s15
      $region32: #{unet_down.2} parent=27 // pred_fallthru
        _
      // Predicated region
      $region33: #{unet_down.2} parent=27 // pred_check
        %p293 = pneg %p106
      $region34: #{unet_down.2} parent=27 // pred_check_branch
        %295 = sbr.rel (%p293) target = $region36
      $region35: #{unet_down.2} parent=27 // pred_region
        _
      $region36: #{unet_down.2} parent=27 // pred_fallthru
        _
    $region28: #{unet_down.2} parent=5 // pred_fallthru
      _
    %p296 = scmp.le.s32.totalorder 2, %s10
    // Predicated region
    $region37: #{unet_down.2} parent=5 // pred_check
      %p297 = pneg %p296
    $region38: #{unet_down.2} parent=5 // pred_check_branch
      %299 = sbr.rel (%p297) target = $region40
    $region39: #{unet_down.2} parent=5 // pred_region
      %s300 = ssub.s32 %s10, 2
      // Predicated region
      $region41: #{unet_down.2} parent=39 // pred_check
        %p301 = pneg %p86
      $region42: #{unet_down.2} parent=39 // pred_check_branch
        %303 = sbr.rel (%p301) target = $region44
      $region43: #{unet_down.2} parent=39 // pred_region
        %s304 = smul.u32 4, %s16
        %p305 = scmp.lt.s32.totalorder %s304, 15
        %s306 = scalar_select %p305, %s304, 15
        %s307 = smul.addr %s306, 8
        %s308 = scalar_lea.vmem %s2, %s307
      $region44: #{unet_down.2} parent=39 // pred_fallthru
        _
      // Predicated region
      $region45: #{unet_down.2} parent=39 // pred_check
        %p309 = pneg %p112
      $region46: #{unet_down.2} parent=39 // pred_check_branch
        %311 = sbr.rel (%p309) target = $region48
      $region47: #{unet_down.2} parent=39 // pred_region
        %p312 = scmp.lt.s32.totalorder %s16, 3
        %s313 = scalar_select %p312, %s16, 3
        %s314 = smul.addr %s313, 8
        %s315 = scalar_lea.vmem %s3, %s314
      $region48: #{unet_down.2} parent=39 // pred_fallthru
        _
    $region40: #{unet_down.2} parent=5 // pred_fallthru
      _
  $region6: #{unet_down.2} parent=0 // loop_footer
    %s14 = sadd.s32 1, %s10
  $region7: #{unet_down.2} parent=0 // loop_footer_branch
    %9 = sbr.rel target = $region3
  $region8: #{unet_down.2} parent=0 // loop_exit
    _

</llo_original>
